<compile_context>
chip_gen: v7x
topology: tpu7x:2x2x1
jax: 0.10.0
libtpu: 0.0.40
codegen_flags: <defaults>
</compile_context>

<pallas_src>
import functools
import math

import numpy as np
import jax
import jax.numpy as jnp
from jax.experimental import pallas as pl
from jax.experimental.pallas import tpu as pltpu


def _round_up(x, m):
    return ((x + m - 1) // m) * m


def _ncs(in_channels, out_channels):
    # exact PyTorch parity: [int(v) for v in np.linspace(in, out, 4)]
    return [int(v) for v in np.linspace(in_channels, out_channels, 4)]


# ----------------------------------------------------------------------------
# Fused kernel:  O = W3 @ relu(W2 @ relu(W1 @ X + b1) + b2) + b3
#   X: (C0, TM) pixels-on-lane,  Wk: (C_out, C_in),  bk: (C_out, 1),  O: (C3, TM)
# ----------------------------------------------------------------------------
def _entropy_params_kernel(x_ref, w1_ref, b1_ref, w2_ref, b2_ref, w3_ref, b3_ref,
                           o_ref):
    cdt = w1_ref.dtype                               # bf16 compute for the MXU
    x = x_ref[...].astype(cdt)                       # (C0, TM)
    h = jnp.dot(w1_ref[...], x, preferred_element_type=jnp.float32)
    h = jnp.maximum(h + b1_ref[...], 0.0)            # f32 epilogue (v5e-safe)
    h = jnp.dot(w2_ref[...], h.astype(cdt), preferred_element_type=jnp.float32)
    h = jnp.maximum(h + b2_ref[...], 0.0)
    h = jnp.dot(w3_ref[...], h.astype(cdt), preferred_element_type=jnp.float32)
    o_ref[...] = (h + b3_ref[...]).astype(o_ref.dtype)


def _pick_tile_pixels(batch, hw, cap=4096):
    """Pixel-tile width (lane axis). Multiple of 128 (dense vst), capped at `cap`,
    shrunk only as needed to give >= 4 total grid blocks (>= 2 per v7x TensorCore)."""
    if hw <= 128:
        return hw                                    # single full-extent block (legal)
    tm = min(cap, (hw // 128) * 128)
    while tm > 128 and batch * (-(-hw // tm)) < 4:
        tm = max(128, (tm // 2) // 128 * 128)
    return tm


# ----------------------------------------------------------------------------
# Parameters (built once: (C_out, C_in) bf16 weights, intermediate channels padded
# to the bf16 sublane granule with zero rows/biases) and forward wrapper.
# ----------------------------------------------------------------------------
def init_entropy_parameters(key, in_channels, out_channels, param_dtype=jnp.bfloat16):
    ncs = _ncs(in_channels, out_channels)
    # Keep the external channel counts exact; pad only the hidden ones to 16 (bf16
    # sublane granule).  Zero-padded rows + zero bias stay exactly 0 through ReLU.
    cpad = [ncs[0], _round_up(ncs[1], 16), _round_up(ncs[2], 16), ncs[3]]
    keys = jax.random.split(key, 6)
    params = {}
    for li in range(3):
        cin, cout = ncs[li], ncs[li + 1]
        cinp, coutp = cpad[li], cpad[li + 1]
        bound = 1.0 / math.sqrt(cin)      # PyTorch Conv2d default init (1x1 kernel)
        w = jax.random.uniform(keys[2 * li], (cout, cin), jnp.float32,
                               minval=-bound, maxval=bound)
        b = jax.random.uniform(keys[2 * li + 1], (cout,), jnp.float32,
                               minval=-bound, maxval=bound)
        params[f"w{li + 1}"] = (jnp.zeros((coutp, cinp), param_dtype)
                                .at[:cout, :cin].set(w.astype(param_dtype)))
        params[f"b{li + 1}"] = (jnp.zeros((coutp, 1), jnp.float32)
                                .at[:cout, 0].set(b))
    return params


def entropy_parameters_forward(params, x_nchw, *, in_channels, out_channels):
    """PyTorch-compatible interface: NCHW in, NCHW out.  No per-call relayout or
    padding passes -- only free reshapes around one fused pallas_call."""
    ncs = _ncs(in_channels, out_channels)
    B, C0, H, W = x_nchw.shape
    assert C0 == ncs[0], (C0, ncs)
    C3 = ncs[3]
    HW = H * W

    x3d = x_nchw.reshape(B, C0, HW)                  # free reshape, stays NCHW in HBM
    TM = _pick_tile_pixels(B, HW)
    n_blk = -(-HW // TM)                             # ragged tail -> partial block

    w1, b1 = params["w1"], params["b1"]
    w2, b2 = params["w2"], params["b2"]
    w3, b3 = params["w3"], params["b3"]

    # Note: the six weight/bias inputs are grid-invariant (constant index_map), so
    # Pallas never re-fetches them across grid steps; they stay VMEM-resident.
    y3d = pl.pallas_call(
        _entropy_params_kernel,
        out_shape=jax.ShapeDtypeStruct((B, C3, HW), x_nchw.dtype),
        grid_spec=pltpu.PrefetchScalarGridSpec(
            num_scalar_prefetch=0,
            grid=(B, n_blk),
            in_specs=[
                pl.BlockSpec((None, C0, TM), lambda b, i: (b, 0, i)),
                pl.BlockSpec(w1.shape, lambda b, i: (0, 0)),
                pl.BlockSpec(b1.shape, lambda b, i: (0, 0)),
                pl.BlockSpec(w2.shape, lambda b, i: (0, 0)),
                pl.BlockSpec(b2.shape, lambda b, i: (0, 0)),
                pl.BlockSpec(w3.shape, lambda b, i: (0, 0)),
                pl.BlockSpec(b3.shape, lambda b, i: (0, 0)),
            ],
            out_specs=pl.BlockSpec((None, C3, TM), lambda b, i: (b, 0, i)),
        ),
        compiler_params=pltpu.CompilerParams(
            dimension_semantics=("parallel", "parallel"),
            vmem_limit_bytes=32 * 1024 * 1024),
    )(x3d, w1, b1, w2, b2, w3, b3)

    return y3d.reshape(B, C3, H, W)


def entropy_parameters_ref(params, x_nchw, *, in_channels, out_channels):
    """Plain-JAX reference (same bf16-stored weights, full f32 activation math)."""
    ncs = _ncs(in_channels, out_channels)
    h = x_nchw.astype(jnp.float32)
    for li in range(3):
        cin, cout = ncs[li], ncs[li + 1]
        w = params[f"w{li + 1}"][:cout, :cin].astype(jnp.float32)   # (Cout, Cin)
        b = params[f"b{li + 1}"][:cout, 0]
        h = jnp.einsum("oi,bihw->bohw", w, h) + b[None, :, None, None]
        if li < 2:
            h = jnp.maximum(h, 0.0)
    return h


# ----------------------------------------------------------------------------
if __name__ == "__main__":
    IN_C, OUT_C = 48, 32            # EntropyParameters(in_channels=48, out_channels=32)
    B, H, W = 2, 16, 16             # ncs = [48, 42, 37, 32]

    key = jax.random.PRNGKey(0)
    kp, kx = jax.random.split(key)
    params = init_entropy_parameters(kp, IN_C, OUT_C)
    x = jax.random.uniform(kx, (B, IN_C, H, W), jnp.float32)

    fwd = jax.jit(functools.partial(entropy_parameters_forward,
                                    in_channels=IN_C, out_channels=OUT_C))
    out = jax.block_until_ready(fwd(params, x))

    ncs = _ncs(IN_C, OUT_C)
    assert out.shape == (B, ncs[3], H, W), out.shape
    assert bool(jnp.all(jnp.isfinite(out)))

    # bf16 MXU inputs with f32 accumulation -> small quantization error vs f32 ref.
    ref = entropy_parameters_ref(params, x, in_channels=IN_C, out_channels=OUT_C)
    err = float(jnp.max(jnp.abs(out - ref)))
    scale = float(jnp.max(jnp.abs(ref))) + 1e-6
    assert err / scale < 3e-2, (err, scale)

    print("KERNEL_OK")
</pallas_src>

<mosaic_0001>
module attributes {stable_mosaic.version = 11 : i64} {
  func.func @_entropy_params_kernel(%arg0: i32, %arg1: i32, %arg2: memref<1x48x128xf32, #tpu.memory_space<vmem>>, %arg3: memref<48x48xbf16, #tpu.memory_space<vmem>>, %arg4: memref<48x1xf32, #tpu.memory_space<vmem>>, %arg5: memref<48x48xbf16, #tpu.memory_space<vmem>>, %arg6: memref<48x1xf32, #tpu.memory_space<vmem>>, %arg7: memref<32x48xbf16, #tpu.memory_space<vmem>>, %arg8: memref<32x1xf32, #tpu.memory_space<vmem>>, %arg9: memref<1x32x128xf32, #tpu.memory_space<vmem>>) attributes {dimension_semantics = [#tpu.dimension_semantics<parallel>, #tpu.dimension_semantics<parallel>], iteration_bounds = array<i64: 2, 2>, scalar_prefetch = 0 : i64, scratch_operands = 0 : i64, tpu.core_type = #tpu.core_type<tc>, window_params = [{transform_indices = @transform_0, window_bounds = array<i64: 1, 48, 128>}, {pipeline_mode = #tpu.pipeline_mode<synchronous>, transform_indices = @transform_1, window_bounds = array<i64: 48, 48>}, {pipeline_mode = #tpu.pipeline_mode<synchronous>, transform_indices = @transform_2, window_bounds = array<i64: 48, 1>}, {pipeline_mode = #tpu.pipeline_mode<synchronous>, transform_indices = @transform_3, window_bounds = array<i64: 48, 48>}, {pipeline_mode = #tpu.pipeline_mode<synchronous>, transform_indices = @transform_4, window_bounds = array<i64: 48, 1>}, {pipeline_mode = #tpu.pipeline_mode<synchronous>, transform_indices = @transform_5, window_bounds = array<i64: 32, 48>}, {pipeline_mode = #tpu.pipeline_mode<synchronous>, transform_indices = @transform_6, window_bounds = array<i64: 32, 1>}, {transform_indices = @transform_7, window_bounds = array<i64: 1, 32, 128>}]} {
    %c0 = arith.constant 0 : index
    %c0_0 = arith.constant 0 : index
    %c0_1 = arith.constant 0 : index
    %0 = vector.load %arg2[%c0, %c0_0, %c0_1] : memref<1x48x128xf32, #tpu.memory_space<vmem>>, vector<1x48x128xf32>
    %1 = vector.shape_cast %0 : vector<1x48x128xf32> to vector<48x128xf32>
    %2 = arith.truncf %1 : vector<48x128xf32> to vector<48x128xbf16>
    %c0_2 = arith.constant 0 : index
    %c0_3 = arith.constant 0 : index
    %3 = vector.load %arg3[%c0_2, %c0_3] : memref<48x48xbf16, #tpu.memory_space<vmem>>, vector<48x48xbf16>
    %cst = arith.constant dense<0.000000e+00> : vector<48x128xf32>
    %4 = tpu.matmul %3, %2, %cst {dimension_numbers = #tpu.dot_dimension_numbers<[1], [0], [0], [1], [0, 0, 1, 1], [], []>} : vector<48x48xbf16>, vector<48x128xbf16>, vector<48x128xf32> -> vector<48x128xf32>
    %c0_4 = arith.constant 0 : index
    %c0_5 = arith.constant 0 : index
    %5 = vector.load %arg4[%c0_4, %c0_5] : memref<48x1xf32, #tpu.memory_space<vmem>>, vector<48x1xf32>
    %6 = vector.broadcast %5 : vector<48x1xf32> to vector<48x128xf32>
    %7 = arith.addf %4, %6 : vector<48x128xf32>
    %cst_6 = arith.constant 0.000000e+00 : f32
    %8 = vector.broadcast %cst_6 : f32 to vector<48x128xf32>
    %9 = arith.maximumf %7, %8 : vector<48x128xf32>
    %c0_7 = arith.constant 0 : index
    %c0_8 = arith.constant 0 : index
    %10 = vector.load %arg5[%c0_7, %c0_8] : memref<48x48xbf16, #tpu.memory_space<vmem>>, vector<48x48xbf16>
    %11 = arith.truncf %9 : vector<48x128xf32> to vector<48x128xbf16>
    %cst_9 = arith.constant dense<0.000000e+00> : vector<48x128xf32>
    %12 = tpu.matmul %10, %11, %cst_9 {dimension_numbers = #tpu.dot_dimension_numbers<[1], [0], [0], [1], [0, 0, 1, 1], [], []>} : vector<48x48xbf16>, vector<48x128xbf16>, vector<48x128xf32> -> vector<48x128xf32>
    %c0_10 = arith.constant 0 : index
    %c0_11 = arith.constant 0 : index
    %13 = vector.load %arg6[%c0_10, %c0_11] : memref<48x1xf32, #tpu.memory_space<vmem>>, vector<48x1xf32>
    %14 = vector.broadcast %13 : vector<48x1xf32> to vector<48x128xf32>
    %15 = arith.addf %12, %14 : vector<48x128xf32>
    %cst_12 = arith.constant 0.000000e+00 : f32
    %16 = vector.broadcast %cst_12 : f32 to vector<48x128xf32>
    %17 = arith.maximumf %15, %16 : vector<48x128xf32>
    %c0_13 = arith.constant 0 : index
    %c0_14 = arith.constant 0 : index
    %18 = vector.load %arg7[%c0_13, %c0_14] : memref<32x48xbf16, #tpu.memory_space<vmem>>, vector<32x48xbf16>
    %19 = arith.truncf %17 : vector<48x128xf32> to vector<48x128xbf16>
    %cst_15 = arith.constant dense<0.000000e+00> : vector<32x128xf32>
    %20 = tpu.matmul %18, %19, %cst_15 {dimension_numbers = #tpu.dot_dimension_numbers<[1], [0], [0], [1], [0, 0, 1, 1], [], []>} : vector<32x48xbf16>, vector<48x128xbf16>, vector<32x128xf32> -> vector<32x128xf32>
    %c0_16 = arith.constant 0 : index
    %c0_17 = arith.constant 0 : index
    %21 = vector.load %arg8[%c0_16, %c0_17] : memref<32x1xf32, #tpu.memory_space<vmem>>, vector<32x1xf32>
    %22 = vector.broadcast %21 : vector<32x1xf32> to vector<32x128xf32>
    %23 = arith.addf %20, %22 : vector<32x128xf32>
    %c0_18 = arith.constant 0 : index
    %c0_19 = arith.constant 0 : index
    %c0_20 = arith.constant 0 : index
    %24 = vector.load %arg9[%c0_18, %c0_19, %c0_20] : memref<1x32x128xf32, #tpu.memory_space<vmem>>, vector<1x32x128xf32>
    %25 = vector.shape_cast %24 : vector<1x32x128xf32> to vector<32x128xf32>
    %26 = vector.shape_cast %23 : vector<32x128xf32> to vector<1x32x128xf32>
    tpu.vector_store %arg9[%c0_18, %c0_19, %c0_20], %26 {strides = array<i32>} : memref<1x32x128xf32, #tpu.memory_space<vmem>>, vector<1x32x128xf32>,
    return
  }
  func.func @transform_0(%arg0: i32, %arg1: i32) -> (i32, i32, i32) {
    %c0_i32 = arith.constant 0 : i32
    %c0_i32_0 = arith.constant 0 : i32
    return %arg0, %c0_i32, %arg1 : i32, i32, i32
  }
  func.func @transform_1(%arg0: i32, %arg1: i32) -> (i32, i32) {
    %c0_i32 = arith.constant 0 : i32
    %c0_i32_0 = arith.constant 0 : i32
    %c0_i32_1 = arith.constant 0 : i32
    return %c0_i32, %c0_i32_0 : i32, i32
  }
  func.func @transform_2(%arg0: i32, %arg1: i32) -> (i32, i32) {
    %c0_i32 = arith.constant 0 : i32
    %c0_i32_0 = arith.constant 0 : i32
    %c0_i32_1 = arith.constant 0 : i32
    return %c0_i32, %c0_i32_0 : i32, i32
  }
  func.func @transform_3(%arg0: i32, %arg1: i32) -> (i32, i32) {
    %c0_i32 = arith.constant 0 : i32
    %c0_i32_0 = arith.constant 0 : i32
    %c0_i32_1 = arith.constant 0 : i32
    return %c0_i32, %c0_i32_0 : i32, i32
  }
  func.func @transform_4(%arg0: i32, %arg1: i32) -> (i32, i32) {
    %c0_i32 = arith.constant 0 : i32
    %c0_i32_0 = arith.constant 0 : i32
    %c0_i32_1 = arith.constant 0 : i32
    return %c0_i32, %c0_i32_0 : i32, i32
  }
  func.func @transform_5(%arg0: i32, %arg1: i32) -> (i32, i32) {
    %c0_i32 = arith.constant 0 : i32
    %c0_i32_0 = arith.constant 0 : i32
    %c0_i32_1 = arith.constant 0 : i32
    return %c0_i32, %c0_i32_0 : i32, i32
  }
  func.func @transform_6(%arg0: i32, %arg1: i32) -> (i32, i32) {
    %c0_i32 = arith.constant 0 : i32
    %c0_i32_0 = arith.constant 0 : i32
    %c0_i32_1 = arith.constant 0 : i32
    return %c0_i32, %c0_i32_0 : i32, i32
  }
  func.func @transform_7(%arg0: i32, %arg1: i32) -> (i32, i32, i32) {
    %c0_i32 = arith.constant 0 : i32
    %c0_i32_0 = arith.constant 0 : i32
    return %arg0, %c0_i32, %arg1 : i32, i32, i32
  }
}

</mosaic_0001>

<llo_original>
// kernel: entropy_parameters_forward.1
$region0: #{entropy_parameters_forward.1}
  #allocation0 [shape = 'u32[]', space=smem, size = 0x4, offset = 0x4, fixed_abs, tag = 'smem constant byte address 0x4 - core index']
  #allocation1 [shape = 'u32[144,128]{1,0:T(1,128)}', space=vmem, size = 0x12000, scoped, tag = 'internal scratch']
  %s0 = inlined_call_operand.vmem [shape: f32[2,48,256], index: 0, kind: input, shape index: {}]
  %s1 = inlined_call_operand.vmem [shape: bf16[48,48], index: 1, kind: input, shape index: {}]
  %s2 = inlined_call_operand.vmem [shape: f32[48,1], index: 2, kind: input, shape index: {}]
  %s3 = inlined_call_operand.vmem [shape: bf16[48,48], index: 3, kind: input, shape index: {}]
  %s4 = inlined_call_operand.vmem [shape: f32[48,1], index: 4, kind: input, shape index: {}]
  %s5 = inlined_call_operand.vmem [shape: bf16[32,48], index: 5, kind: input, shape index: {}]
  %s6 = inlined_call_operand.vmem [shape: f32[32,1], index: 6, kind: input, shape index: {}]
  %s7 = inlined_call_operand.vmem [shape: f32[2,32,256], index: 7, kind: output, shape index: {}]
  %s8 = sld [smem:[#allocation0]]
  $region133: #{entropy_parameters_forward.1} parent=0
    _
  %s10 = ssub.s32 1, %s8
  %s11 = scalar_select 0, %s10, %s8
  $region1: #{entropy_parameters_forward.1} parent=0
    #allocation2 [shape = 'u8[49152]{0}', space=vmem, size = 0xc000, scoped, tag = 'input window, operand 0']
    #allocation3 [shape = 'u8[32768]{0}', space=vmem, size = 0x8000, scoped, tag = 'output window, operand 0']
    loop: start=0, step=1, limit=6
    $region2: #{entropy_parameters_forward.1} parent=1 // loop_pre_header
      _
    $region3: #{entropy_parameters_forward.1} parent=1 // loop_header
      %s13 = sphi 0, %s17
      %p14 = scmp.ge.s32.totalorder %s13, 6
      %s20 = sphi 0, %s32
      %s21 = sphi 0, %s28
      %s22 = sphi 0, %s20
      %s23 = sphi 0, %s21
      %s24 = sphi 0, %s22
      %s25 = sphi 0, %s23
      %s37 = sphi 0, %s39
      %s40 = sphi 0, %s37
      %s41 = sphi 0, %s40
      %s57 = sphi 0, %s41
      %s61 = sphi 0, %s61
      %s63 = sphi 0, %s61
      %s64 = sphi 0, %s63
      %s78 = sphi 0, %s64
      %s82 = sphi 0, %s82
      %s84 = sphi 0, %s82
      %s85 = sphi 0, %s84
      %s99 = sphi 0, %s85
      %s103 = sphi 0, %s103
      %s105 = sphi 0, %s103
      %s106 = sphi 0, %s105
      %s120 = sphi 0, %s106
      %s124 = sphi 0, %s124
      %s126 = sphi 0, %s124
      %s127 = sphi 0, %s126
      %s141 = sphi 0, %s127
      %s145 = sphi 0, %s145
      %s147 = sphi 0, %s145
      %s148 = sphi 0, %s147
      %s162 = sphi 0, %s148
      %s166 = sphi 0, %s166
      %s168 = sphi 0, %s166
      %s169 = sphi 0, %s168
      %s183 = sphi 0, %s169
      %s191 = sphi 0, %s193
      %s194 = sphi 0, %s191
      %s195 = sphi 0, %s194
      %s211 = sphi 0, %s195
    $region4: #{entropy_parameters_forward.1} parent=1 // loop_header_branch
      %16 = sbr.rel (%p14) target = $region8
    $region5: #{entropy_parameters_forward.1} parent=1 // loop_body
      %s18 = ssub.s32 %s13, 1
      %s19 = ssub.s32 %s13, 2
      %s26 = sadd.s32 1, %s21
      %p27 = scmp.ge.s32.totalorder %s26, 2
      %s28 = scalar_select %p27, 0, %s26
      %s29 = sadd.s32 1, %s20
      %s30 = scalar_select %p27, %s29, %s20
      %p31 = scmp.ge.s32.totalorder %s30, 2
      %s32 = scalar_select %p31, 0, %s30
      %s33 = ssub.s32 %s20, %s32
      %s34 = ssub.s32 %s21, %s28
      %s35 = sor.u32 %s33, %s34
      %p36 = scmp.eq.s32.totalorder %s35, 0
      %s38 = sadd.s32 %s37, 1
      %s39 = scalar_select %p36, %s37, %s38
      %p42 = pneg %p36
      %p43 = scmp.eq.s32.totalorder %s13, 3
      %p44 = por %p42, %p43
      %p45 = scmp.ne.s32.totalorder %s37, %s40
      %p46 = scmp.eq.s32.totalorder %s13, 0
      %p47 = por %p45, %p46
      %p48 = scmp.ne.s32.totalorder %s37, %s40
      %p49 = scmp.eq.s32.totalorder %s18, 3
      %p50 = por %p48, %p49
      %p51 = scmp.ne.s32.totalorder %s40, %s41
      %p52 = scmp.eq.s32.totalorder %s18, 0
      %p53 = por %p51, %p52
      %p54 = scmp.ne.s32.totalorder %s40, %s41
      %p55 = scmp.eq.s32.totalorder %s19, 3
      %p56 = por %p54, %p55
      %p58 = scmp.ne.s32.totalorder %s41, %s57
      %p59 = scmp.eq.s32.totalorder %s19, 0
      %p60 = por %p58, %p59
      %s62 = sadd.s32 %s61, 1
      %p65 = scmp.eq.s32.totalorder %s13, 3
      %p66 = scmp.ne.s32.totalorder %s61, %s63
      %p67 = scmp.eq.s32.totalorder %s13, 0
      %p68 = por %p66, %p67
      %p69 = scmp.ne.s32.totalorder %s61, %s63
      %p70 = scmp.eq.s32.totalorder %s18, 3
      %p71 = por %p69, %p70
      %p72 = scmp.ne.s32.totalorder %s63, %s64
      %p73 = scmp.eq.s32.totalorder %s18, 0
      %p74 = por %p72, %p73
      %p75 = scmp.ne.s32.totalorder %s63, %s64
      %p76 = scmp.eq.s32.totalorder %s19, 3
      %p77 = por %p75, %p76
      %p79 = scmp.ne.s32.totalorder %s64, %s78
      %p80 = scmp.eq.s32.totalorder %s19, 0
      %p81 = por %p79, %p80
      %s83 = sadd.s32 %s82, 1
      %p86 = scmp.eq.s32.totalorder %s13, 3
      %p87 = scmp.ne.s32.totalorder %s82, %s84
      %p88 = scmp.eq.s32.totalorder %s13, 0
      %p89 = por %p87, %p88
      %p90 = scmp.ne.s32.totalorder %s82, %s84
      %p91 = scmp.eq.s32.totalorder %s18, 3
      %p92 = por %p90, %p91
      %p93 = scmp.ne.s32.totalorder %s84, %s85
      %p94 = scmp.eq.s32.totalorder %s18, 0
      %p95 = por %p93, %p94
      %p96 = scmp.ne.s32.totalorder %s84, %s85
      %p97 = scmp.eq.s32.totalorder %s19, 3
      %p98 = por %p96, %p97
      %p100 = scmp.ne.s32.totalorder %s85, %s99
      %p101 = scmp.eq.s32.totalorder %s19, 0
      %p102 = por %p100, %p101
      %s104 = sadd.s32 %s103, 1
      %p107 = scmp.eq.s32.totalorder %s13, 3
      %p108 = scmp.ne.s32.totalorder %s103, %s105
      %p109 = scmp.eq.s32.totalorder %s13, 0
      %p110 = por %p108, %p109
      %p111 = scmp.ne.s32.totalorder %s103, %s105
      %p112 = scmp.eq.s32.totalorder %s18, 3
      %p113 = por %p111, %p112
      %p114 = scmp.ne.s32.totalorder %s105, %s106
      %p115 = scmp.eq.s32.totalorder %s18, 0
      %p116 = por %p114, %p115
      %p117 = scmp.ne.s32.totalorder %s105, %s106
      %p118 = scmp.eq.s32.totalorder %s19, 3
      %p119 = por %p117, %p118
      %p121 = scmp.ne.s32.totalorder %s106, %s120
      %p122 = scmp.eq.s32.totalorder %s19, 0
      %p123 = por %p121, %p122
      %s125 = sadd.s32 %s124, 1
      %p128 = scmp.eq.s32.totalorder %s13, 3
      %p129 = scmp.ne.s32.totalorder %s124, %s126
      %p130 = scmp.eq.s32.totalorder %s13, 0
      %p131 = por %p129, %p130
      %p132 = scmp.ne.s32.totalorder %s124, %s126
      %p133 = scmp.eq.s32.totalorder %s18, 3
      %p134 = por %p132, %p133
      %p135 = scmp.ne.s32.totalorder %s126, %s127
      %p136 = scmp.eq.s32.totalorder %s18, 0
      %p137 = por %p135, %p136
      %p138 = scmp.ne.s32.totalorder %s126, %s127
      %p139 = scmp.eq.s32.totalorder %s19, 3
      %p140 = por %p138, %p139
      %p142 = scmp.ne.s32.totalorder %s127, %s141
      %p143 = scmp.eq.s32.totalorder %s19, 0
      %p144 = por %p142, %p143
      %s146 = sadd.s32 %s145, 1
      %p149 = scmp.eq.s32.totalorder %s13, 3
      %p150 = scmp.ne.s32.totalorder %s145, %s147
      %p151 = scmp.eq.s32.totalorder %s13, 0
      %p152 = por %p150, %p151
      %p153 = scmp.ne.s32.totalorder %s145, %s147
      %p154 = scmp.eq.s32.totalorder %s18, 3
      %p155 = por %p153, %p154
      %p156 = scmp.ne.s32.totalorder %s147, %s148
      %p157 = scmp.eq.s32.totalorder %s18, 0
      %p158 = por %p156, %p157
      %p159 = scmp.ne.s32.totalorder %s147, %s148
      %p160 = scmp.eq.s32.totalorder %s19, 3
      %p161 = por %p159, %p160
      %p163 = scmp.ne.s32.totalorder %s148, %s162
      %p164 = scmp.eq.s32.totalorder %s19, 0
      %p165 = por %p163, %p164
      %s167 = sadd.s32 %s166, 1
      %p170 = scmp.eq.s32.totalorder %s13, 3
      %p171 = scmp.ne.s32.totalorder %s166, %s168
      %p172 = scmp.eq.s32.totalorder %s13, 0
      %p173 = por %p171, %p172
      %p174 = scmp.ne.s32.totalorder %s166, %s168
      %p175 = scmp.eq.s32.totalorder %s18, 3
      %p176 = por %p174, %p175
      %p177 = scmp.ne.s32.totalorder %s168, %s169
      %p178 = scmp.eq.s32.totalorder %s18, 0
      %p179 = por %p177, %p178
      %p180 = scmp.ne.s32.totalorder %s168, %s169
      %p181 = scmp.eq.s32.totalorder %s19, 3
      %p182 = por %p180, %p181
      %p184 = scmp.ne.s32.totalorder %s169, %s183
      %p185 = scmp.eq.s32.totalorder %s19, 0
      %p186 = por %p184, %p185
      %s187 = ssub.s32 %s20, %s32
      %s188 = ssub.s32 %s21, %s28
      %s189 = sor.u32 %s187, %s188
      %p190 = scmp.eq.s32.totalorder %s189, 0
      %s192 = sadd.s32 %s191, 1
      %s193 = scalar_select %p190, %s191, %s192
      %p196 = pneg %p190
      %p197 = scmp.eq.s32.totalorder %s13, 3
      %p198 = por %p196, %p197
      %p199 = scmp.ne.s32.totalorder %s191, %s194
      %p200 = scmp.eq.s32.totalorder %s13, 0
      %p201 = por %p199, %p200
      %p202 = scmp.ne.s32.totalorder %s191, %s194
      %p203 = scmp.eq.s32.totalorder %s18, 3
      %p204 = por %p202, %p203
      %p205 = scmp.ne.s32.totalorder %s194, %s195
      %p206 = scmp.eq.s32.totalorder %s18, 0
      %p207 = por %p205, %p206
      %p208 = scmp.ne.s32.totalorder %s194, %s195
      %p209 = scmp.eq.s32.totalorder %s19, 3
      %p210 = por %p208, %p209
      %p212 = scmp.ne.s32.totalorder %s195, %s211
      %p213 = scmp.eq.s32.totalorder %s19, 0
      %p214 = por %p212, %p213
      %p215 = scmp.le.s32.totalorder 1, %s13
      %p216 = scmp.lt.s32.totalorder %s13, 5
      %p217 = pnand %p215, %p216
      %p218 = pneg %p217
      // Predicated region
      $region9: #{entropy_parameters_forward.1} parent=5 // pred_check
        _
      $region10: #{entropy_parameters_forward.1} parent=5 // pred_check_branch
        %220 = sbr.rel (%p217) target = $region12
      $region11: #{entropy_parameters_forward.1} parent=5 // pred_region
        %s221 = ssub.s32 %s13, 1
        // Predicated region
        $region13: #{entropy_parameters_forward.1} parent=11 // pred_check
          %p222 = pneg %p74
        $region14: #{entropy_parameters_forward.1} parent=11 // pred_check_branch
          %224 = sbr.rel (%p222) target = $region16
        $region15: #{entropy_parameters_forward.1} parent=11 // pred_region
          _
        $region16: #{entropy_parameters_forward.1} parent=11 // pred_fallthru
          _
        // Predicated region
        $region17: #{entropy_parameters_forward.1} parent=11 // pred_check
          %p225 = pneg %p95
        $region18: #{entropy_parameters_forward.1} parent=11 // pred_check_branch
          %227 = sbr.rel (%p225) target = $region20
        $region19: #{entropy_parameters_forward.1} parent=11 // pred_region
          _
        $region20: #{entropy_parameters_forward.1} parent=11 // pred_fallthru
          _
        // Predicated region
        $region21: #{entropy_parameters_forward.1} parent=11 // pred_check
          %p228 = pneg %p116
        $region22: #{entropy_parameters_forward.1} parent=11 // pred_check_branch
          %230 = sbr.rel (%p228) target = $region24
        $region23: #{entropy_parameters_forward.1} parent=11 // pred_region
          _
        $region24: #{entropy_parameters_forward.1} parent=11 // pred_fallthru
          _
        // Predicated region
        $region25: #{entropy_parameters_forward.1} parent=11 // pred_check
          %p231 = pneg %p137
        $region26: #{entropy_parameters_forward.1} parent=11 // pred_check_branch
          %233 = sbr.rel (%p231) target = $region28
        $region27: #{entropy_parameters_forward.1} parent=11 // pred_region
          _
        $region28: #{entropy_parameters_forward.1} parent=11 // pred_fallthru
          _
        // Predicated region
        $region29: #{entropy_parameters_forward.1} parent=11 // pred_check
          %p234 = pneg %p158
        $region30: #{entropy_parameters_forward.1} parent=11 // pred_check_branch
          %236 = sbr.rel (%p234) target = $region32
        $region31: #{entropy_parameters_forward.1} parent=11 // pred_region
          _
        $region32: #{entropy_parameters_forward.1} parent=11 // pred_fallthru
          _
        // Predicated region
        $region33: #{entropy_parameters_forward.1} parent=11 // pred_check
          %p237 = pneg %p179
        $region34: #{entropy_parameters_forward.1} parent=11 // pred_check_branch
          %239 = sbr.rel (%p237) target = $region36
        $region35: #{entropy_parameters_forward.1} parent=11 // pred_region
          _
        $region36: #{entropy_parameters_forward.1} parent=11 // pred_fallthru
          _
      $region12: #{entropy_parameters_forward.1} parent=5 // pred_fallthru
        _
      %p240 = scmp.lt.s32.totalorder %s13, 4
      // Predicated region
      $region37: #{entropy_parameters_forward.1} parent=5 // pred_check
        %p241 = pneg %p240
      $region38: #{entropy_parameters_forward.1} parent=5 // pred_check_branch
        %243 = sbr.rel (%p241) target = $region40
      $region39: #{entropy_parameters_forward.1} parent=5 // pred_region
        // Predicated region
        $region41: #{entropy_parameters_forward.1} parent=39 // pred_check
          %p244 = pneg %p47
        $region42: #{entropy_parameters_forward.1} parent=39 // pred_check_branch
          %246 = sbr.rel (%p244) target = $region44
        $region43: #{entropy_parameters_forward.1} parent=39 // pred_region
          %s247 = sand.u32 %s37, 1
          %s248 = sand.u32 %s37, 1
          %s249 = smul.addr %s248, 48
          %s250 = scalar_lea.vmem [#allocation2], %s249
          %s251 = smul.addr %s20, 12
          %s252 = sadd.s32 %s21, %s251
          %s253 = smul.addr %s252, 8
          %s254 = scalar_lea.vmem %s0, %s253
          // Predicated region
          $region45: #{entropy_parameters_forward.1} parent=43 // pred_check
            _
          $region46: #{entropy_parameters_forward.1} parent=43 // pred_check_branch
            %256 = sbr.rel (0) target = $region48
          $region47: #{entropy_parameters_forward.1} parent=43 // pred_region
            // Predicated region
            $region49: #{entropy_parameters_forward.1} parent=47 // pred_check
              _
            $region50: #{entropy_parameters_forward.1} parent=47 // pred_check_branch
              %258 = sbr.rel (0) target = $region52
            $region51: #{entropy_parameters_forward.1} parent=47 // pred_region
              // Predicated region
              $region64: #{entropy_parameters_forward.1} parent=51 // pred_check
                _
              $region65: #{entropy_parameters_forward.1} parent=51 // pred_check_branch
                %283 = sbr.rel (0) target = $region67
              $region66: #{entropy_parameters_forward.1} parent=51 // pred_region
                loop: start=0, step=1, limit=1
                $region68: #{entropy_parameters_forward.1} parent=66 // loop_pre_header
                  _
                $region69: #{entropy_parameters_forward.1} parent=66 // loop_header
                  %s285 = sphi 0, %s289
                  %p286 = scmp.ge.s32.totalorder %s285, 1
                  %s290 = sphi %s254, %s254
                  %s291 = sphi %s250, %s250
                $region70: #{entropy_parameters_forward.1} parent=66 // loop_header_branch
                  %288 = sbr.rel (%p286) target = $region74
                $region71: #{entropy_parameters_forward.1} parent=66 // loop_body
                  %v292 = vld [vmem:[%s290] sm:$0xff]
                  %293 = vst [vmem:[%s291] sm:$0xff] %v292
                  %v294 = vld [vmem:[%s290 + $0x10] sm:$0xff]
                  %295 = vst [vmem:[%s291 + $0x8] sm:$0xff] %v294
                  %v296 = vld [vmem:[%s290 + $0x20] sm:$0xff]
                  %297 = vst [vmem:[%s291 + $0x10] sm:$0xff] %v296
                  %v298 = vld [vmem:[%s290 + $0x30] sm:$0xff]
                  %299 = vst [vmem:[%s291 + $0x18] sm:$0xff] %v298
                  %v300 = vld [vmem:[%s290 + $0x40] sm:$0xff]
                  %301 = vst [vmem:[%s291 + $0x20] sm:$0xff] %v300
                  %v302 = vld [vmem:[%s290 + $0x50] sm:$0xff]
                  %303 = vst [vmem:[%s291 + $0x28] sm:$0xff] %v302
                $region72: #{entropy_parameters_forward.1} parent=66 // loop_footer
                  %s289 = sadd.s32 1, %s285
                $region73: #{entropy_parameters_forward.1} parent=66 // loop_footer_branch
                  %284 = sbr.rel target = $region69
                $region74: #{entropy_parameters_forward.1} parent=66 // loop_exit
                  _
              $region67: #{entropy_parameters_forward.1} parent=51 // pred_fallthru
                _
              // Predicated region
              $region75: #{entropy_parameters_forward.1} parent=51 // pred_check
                _
              $region76: #{entropy_parameters_forward.1} parent=51 // pred_check_branch
                %305 = sbr.rel target = $region78
              $region77: #{entropy_parameters_forward.1} parent=51 // pred_region
                _
              $region78: #{entropy_parameters_forward.1} parent=51 // pred_fallthru
                _
            $region52: #{entropy_parameters_forward.1} parent=47 // pred_fallthru
              _
            // Predicated region
            $region53: #{entropy_parameters_forward.1} parent=47 // pred_check
              _
            $region54: #{entropy_parameters_forward.1} parent=47 // pred_check_branch
              %260 = sbr.rel target = $region56
            $region55: #{entropy_parameters_forward.1} parent=47 // pred_region
              loop: start=0, step=1, limit=1
              $region57: #{entropy_parameters_forward.1} parent=55 // loop_pre_header
                _
              $region58: #{entropy_parameters_forward.1} parent=55 // loop_header
                %s263 = sphi 0, %s267
                %p264 = scmp.ge.s32.totalorder %s263, 1
                %s268 = sphi %s254, %s254
                %s269 = sphi %s250, %s250
              $region59: #{entropy_parameters_forward.1} parent=55 // loop_header_branch
                %266 = sbr.rel (%p264) target = $region63
              $region60: #{entropy_parameters_forward.1} parent=55 // loop_body
                %v270 = vld [vmem:[%s268] sm:$0xff]
                %271 = vst [vmem:[%s269] sm:$0xff] %v270
                %v272 = vld [vmem:[%s268 + $0x10] sm:$0xff]
                %273 = vst [vmem:[%s269 + $0x8] sm:$0xff] %v272
                %v274 = vld [vmem:[%s268 + $0x20] sm:$0xff]
                %275 = vst [vmem:[%s269 + $0x10] sm:$0xff] %v274
                %v276 = vld [vmem:[%s268 + $0x30] sm:$0xff]
                %277 = vst [vmem:[%s269 + $0x18] sm:$0xff] %v276
                %v278 = vld [vmem:[%s268 + $0x40] sm:$0xff]
                %279 = vst [vmem:[%s269 + $0x20] sm:$0xff] %v278
                %v280 = vld [vmem:[%s268 + $0x50] sm:$0xff]
                %281 = vst [vmem:[%s269 + $0x28] sm:$0xff] %v280
              $region61: #{entropy_parameters_forward.1} parent=55 // loop_footer
                %s267 = sadd.s32 1, %s263
              $region62: #{entropy_parameters_forward.1} parent=55 // loop_footer_branch
                %262 = sbr.rel target = $region58
              $region63: #{entropy_parameters_forward.1} parent=55 // loop_exit
                _
            $region56: #{entropy_parameters_forward.1} parent=47 // pred_fallthru
              _
          $region48: #{entropy_parameters_forward.1} parent=43 // pred_fallthru
            _
          %306 = vnop
        $region44: #{entropy_parameters_forward.1} parent=39 // pred_fallthru
          _
      $region40: #{entropy_parameters_forward.1} parent=5 // pred_fallthru
        _
      %p307 = scmp.le.s32.totalorder 1, %s13
      %p308 = scmp.lt.s32.totalorder %s13, 5
      %p309 = pnand %p307, %p308
      %p310 = pneg %p309
      // Predicated region
      $region79: #{entropy_parameters_forward.1} parent=5 // pred_check
        _
      $region80: #{entropy_parameters_forward.1} parent=5 // pred_check_branch
        %312 = sbr.rel (%p309) target = $region82
      $region81: #{entropy_parameters_forward.1} parent=5 // pred_region
        %s313 = ssub.s32 %s13, 1
        %s314 = sand.u32 %s40, 1
        %s315 = sand.u32 %s40, 1
        %s316 = smul.addr %s315, 48
        %s317 = scalar_lea.vmem [#allocation2], %s316
        // Predicated region
        $region83: #{entropy_parameters_forward.1} parent=81 // pred_check
          %p318 = pneg %p53
        $region84: #{entropy_parameters_forward.1} parent=81 // pred_check_branch
          %320 = sbr.rel (%p318) target = $region86
        $region85: #{entropy_parameters_forward.1} parent=81 // pred_region
          _
        $region86: #{entropy_parameters_forward.1} parent=81 // pred_fallthru
          _
        %s321 = sand.u32 %s40, 1
        %s322 = sand.u32 %s40, 1
        %s323 = smul.addr %s322, 48
        %s324 = scalar_lea.vmem [#allocation2], %s323
        %p325 = pneg %p53
        %p326 = pneg %p50
        %p327 = pneg %p74
        %p328 = pneg %p71
        %p329 = pneg %p95
        %p330 = pneg %p92
        %p331 = pneg %p116
        %p332 = pneg %p113
        %p333 = pneg %p137
        %p334 = pneg %p134
        %p335 = pneg %p158
        %p336 = pneg %p155
        %p337 = pneg %p179
        %p338 = pneg %p176
        %p339 = pneg %p207
        %p340 = pneg %p204
        %s341 = sand.u32 %s194, 1
        %s342 = sand.u32 %s194, 1
        %s343 = smul.addr %s342, 32
        %s344 = scalar_lea.vmem [#allocation3], %s343
        %v346 = vld [vmem:[%s317] sm:$0xff]
        %v347 = vld [vmem:[%s317 + $0x8] sm:$0xff]
        %v348 = vld [vmem:[%s317 + $0x10] sm:$0xff]
        %v349 = vld [vmem:[%s317 + $0x18] sm:$0xff]
        %v350 = vld [vmem:[%s317 + $0x20] sm:$0xff]
        %v351 = vld [vmem:[%s317 + $0x28] sm:$0xff]
        %v352 = vpack.c.bf16 %v347, %v346
        %v353 = vpack.c.bf16 %v349, %v348
        %v354 = vpack.c.bf16 %v351, %v350
        %v355 = vld [vmem:[%s1] sm:$0xf]
        %v356 = vld [vmem:[%s1 + $0x4] sm:$0xf]
        %v357 = vld [vmem:[%s1 + $0x8] sm:$0xf]
        %v358 = vld [vmem:[%s1 + $0xc] sm:$0xf]
        %v359 = vld [vmem:[%s1 + $0x10] sm:$0xf]
        %v360 = vld [vmem:[%s1 + $0x14] sm:$0xf]
        %v361 = vld [vmem:[%s2] sm:$0xff]
        %v362 = vld [vmem:[%s2 + $0x8] sm:$0xff]
        %v363 = vld [vmem:[%s2 + $0x10] sm:$0xff]
        %v364 = vld [vmem:[%s2 + $0x18] sm:$0xff]
        %v365 = vld [vmem:[%s2 + $0x20] sm:$0xff]
        %v366 = vld [vmem:[%s2 + $0x28] sm:$0xff]
        %368 = vset.pattern.permute.xlu0 0
        %369 = vperm.xlu0 %368, %v361
        %v370 = vpop.permute.xlu0 %369
        %373 = vset.pattern.permute.xlu0 0
        %374 = vperm.xlu0 %373, %v362
        %v375 = vpop.permute.xlu0 %374
        %378 = vset.pattern.permute.xlu0 0
        %379 = vperm.xlu0 %378, %v363
        %v380 = vpop.permute.xlu0 %379
        %383 = vset.pattern.permute.xlu0 0
        %384 = vperm.xlu0 %383, %v364
        %v385 = vpop.permute.xlu0 %384
        %388 = vset.pattern.permute.xlu0 0
        %389 = vperm.xlu0 %388, %v365
        %v390 = vpop.permute.xlu0 %389
        %393 = vset.pattern.permute.xlu0 0
        %394 = vperm.xlu0 %393, %v366
        %v395 = vpop.permute.xlu0 %394
        %v403 = vunpack.c.l.b16 %v355
        %v404 = vunpack.c.l.b16 %v356
        %v405 = vunpack.c.l.b16 %v357
        %v406 = vunpack.c.l.b16 %v358
        %v407 = vunpack.c.l.b16 %v359
        %v408 = vunpack.c.l.b16 %v360
        %v409 = vpack.c.b16 %v404, %v403
        %v410 = vpack.c.b16 %v406, %v405
        %v411 = vpack.c.b16 %v408, %v407
        %vm412 = vcmask 392192
        %v414 = vsel %vm412, %v409, 0
        %v417 = vsel %vm412, %v410, 0
        %v420 = vsel %vm412, %v411, 0
        %422 = vmatprep.subr.bf16.mxu0 0
        %423 = vmatpush1.bf16.msra.mxu0 %v352
        %424 = vmatprep.subr.bf16.mxu0 0
        %425 = vmatpush1.bf16.msra.mxu0 %v353
        %426 = vmatprep.subr.bf16.mxu0 0
        %427 = vmatpush1.bf16.msra.mxu0 %v354
        %428 = vmatprep.subr.bf16.mxu0 0
        %429 = vmatpush1.bf16.msra.mxu0 0
        %430 = vmatprep.subr.bf16.mxu0 0
        %431 = vmatpush1.bf16.msra.mxu0 0
        %432 = vmatprep.subr.bf16.mxu0 0
        %433 = vmatpush1.bf16.msra.mxu0 0
        %434 = vmatprep.subr.bf16.mxu0 0
        %435 = vmatpush1.bf16.msra.mxu0 0
        %436 = vmatprep.subr.bf16.mxu0 0
        %437 = vmatpush1.bf16.msra.mxu0 0
        %438 = vmatprep.subr.bf16.mxu0 0
        %439 = vmatpush1.bf16.msra.mxu0 0
        %440 = vmatprep.subr.bf16.mxu0 0
        %441 = vmatpush1.bf16.msra.mxu0 0
        %442 = vmatprep.subr.bf16.mxu0 0
        %443 = vmatpush1.bf16.msra.mxu0 0
        %444 = vmatprep.subr.bf16.mxu0 0
        %445 = vmatpush1.bf16.msra.mxu0 0
        %446 = vmatprep.subr.bf16.mxu0 0
        %447 = vmatpush1.bf16.msra.mxu0 0
        %448 = vmatprep.subr.bf16.mxu0 0
        %449 = vmatpush1.bf16.msra.mxu0 0
        %450 = vmatprep.subr.bf16.mxu0 0
        %451 = vmatpush1.bf16.msra.mxu0 0
        %452 = vmatprep.subr.bf16.mxu0 0
        %453 = vmatpush1.bf16.msra.mxu0 0
        %454 = vmatprep.mubr.bf16.mxu0 0
        %455 = vmatmul.mubr.bf16.gmra.mrb[0].mxu0 %v414
        %v456 = vpop.f32.mrb[0].mxu0
        %v457 = vadd.f32 %v370, %v456
        %v458 = vpop.f32.mrb[0].mxu0
        %v459 = vpop.f32.mrb[0].mxu0
        %v460 = vadd.f32 %v375, %v459
        %v461 = vpop.f32.mrb[0].mxu0
        %462 = vmatprep.mubr.bf16.mxu0 0
        %463 = vmatmul.mubr.bf16.gmra.mrb[0].mxu0 %v417
        %v464 = vpop.f32.mrb[0].mxu0
        %v465 = vadd.f32 %v380, %v464
        %v466 = vpop.f32.mrb[0].mxu0
        %v467 = vpop.f32.mrb[0].mxu0
        %v468 = vadd.f32 %v385, %v467
        %v469 = vpop.f32.mrb[0].mxu0
        %470 = vmatprep.mubr.bf16.mxu0 0
        %471 = vmatmul.mubr.bf16.gmra.mrb[0].mxu0 %v420
        %v472 = vpop.f32.mrb[0].mxu0
        %v473 = vadd.f32 %v390, %v472
        %v474 = vpop.f32.mrb[0].mxu0
        %v475 = vpop.f32.mrb[0].mxu0
        %v476 = vadd.f32 %v395, %v475
        %v477 = vpop.f32.mrb[0].mxu0
        %478 = vdwg.mxu0
        %v479 = vmax.f32 %v457, 0.0
        %v480 = vmax.f32 %v460, 0.0
        %v481 = vmax.f32 %v465, 0.0
        %v482 = vmax.f32 %v468, 0.0
        %v483 = vmax.f32 %v473, 0.0
        %v484 = vmax.f32 %v476, 0.0
        %v485 = vld [vmem:[%s3] sm:$0xf]
        %v486 = vld [vmem:[%s3 + $0x4] sm:$0xf]
        %v487 = vld [vmem:[%s3 + $0x8] sm:$0xf]
        %v488 = vld [vmem:[%s3 + $0xc] sm:$0xf]
        %v489 = vld [vmem:[%s3 + $0x10] sm:$0xf]
        %v490 = vld [vmem:[%s3 + $0x14] sm:$0xf]
        %v491 = vpack.c.bf16 %v480, %v479
        %v492 = vpack.c.bf16 %v482, %v481
        %v493 = vpack.c.bf16 %v484, %v483
        %v494 = vld [vmem:[%s4] sm:$0xff]
        %v495 = vld [vmem:[%s4 + $0x8] sm:$0xff]
        %v496 = vld [vmem:[%s4 + $0x10] sm:$0xff]
        %v497 = vld [vmem:[%s4 + $0x18] sm:$0xff]
        %v498 = vld [vmem:[%s4 + $0x20] sm:$0xff]
        %v499 = vld [vmem:[%s4 + $0x28] sm:$0xff]
        %501 = vset.pattern.permute.xlu0 0
        %502 = vperm.xlu0 %501, %v494
        %v503 = vpop.permute.xlu0 %502
        %506 = vset.pattern.permute.xlu0 0
        %507 = vperm.xlu0 %506, %v495
        %v508 = vpop.permute.xlu0 %507
        %511 = vset.pattern.permute.xlu0 0
        %512 = vperm.xlu0 %511, %v496
        %v513 = vpop.permute.xlu0 %512
        %516 = vset.pattern.permute.xlu0 0
        %517 = vperm.xlu0 %516, %v497
        %v518 = vpop.permute.xlu0 %517
        %521 = vset.pattern.permute.xlu0 0
        %522 = vperm.xlu0 %521, %v498
        %v523 = vpop.permute.xlu0 %522
        %526 = vset.pattern.permute.xlu0 0
        %527 = vperm.xlu0 %526, %v499
        %v528 = vpop.permute.xlu0 %527
        %v536 = vunpack.c.l.b16 %v485
        %v537 = vunpack.c.l.b16 %v486
        %v538 = vunpack.c.l.b16 %v487
        %v539 = vunpack.c.l.b16 %v488
        %v540 = vunpack.c.l.b16 %v489
        %v541 = vunpack.c.l.b16 %v490
        %v542 = vpack.c.b16 %v537, %v536
        %v543 = vpack.c.b16 %v539, %v538
        %v544 = vpack.c.b16 %v541, %v540
        %v546 = vsel %vm412, %v542, 0
        %v549 = vsel %vm412, %v543, 0
        %v552 = vsel %vm412, %v544, 0
        %554 = vmatprep.subr.bf16.mxu0 0
        %555 = vmatpush1.bf16.msra.mxu0 %v491
        %556 = vmatprep.subr.bf16.mxu0 0
        %557 = vmatpush1.bf16.msra.mxu0 %v492
        %558 = vmatprep.subr.bf16.mxu0 0
        %559 = vmatpush1.bf16.msra.mxu0 %v493
        %560 = vmatprep.subr.bf16.mxu0 0
        %561 = vmatpush1.bf16.msra.mxu0 0
        %562 = vmatprep.subr.bf16.mxu0 0
        %563 = vmatpush1.bf16.msra.mxu0 0
        %564 = vmatprep.subr.bf16.mxu0 0
        %565 = vmatpush1.bf16.msra.mxu0 0
        %566 = vmatprep.subr.bf16.mxu0 0
        %567 = vmatpush1.bf16.msra.mxu0 0
        %568 = vmatprep.subr.bf16.mxu0 0
        %569 = vmatpush1.bf16.msra.mxu0 0
        %570 = vmatprep.subr.bf16.mxu0 0
        %571 = vmatpush1.bf16.msra.mxu0 0
        %572 = vmatprep.subr.bf16.mxu0 0
        %573 = vmatpush1.bf16.msra.mxu0 0
        %574 = vmatprep.subr.bf16.mxu0 0
        %575 = vmatpush1.bf16.msra.mxu0 0
        %576 = vmatprep.subr.bf16.mxu0 0
        %577 = vmatpush1.bf16.msra.mxu0 0
        %578 = vmatprep.subr.bf16.mxu0 0
        %579 = vmatpush1.bf16.msra.mxu0 0
        %580 = vmatprep.subr.bf16.mxu0 0
        %581 = vmatpush1.bf16.msra.mxu0 0
        %582 = vmatprep.subr.bf16.mxu0 0
        %583 = vmatpush1.bf16.msra.mxu0 0
        %584 = vmatprep.subr.bf16.mxu0 0
        %585 = vmatpush1.bf16.msra.mxu0 0
        %586 = vmatprep.mubr.bf16.mxu0 0
        %587 = vmatmul.mubr.bf16.gmra.mrb[0].mxu0 %v546
        %v588 = vpop.f32.mrb[0].mxu0
        %v589 = vadd.f32 %v503, %v588
        %v590 = vpop.f32.mrb[0].mxu0
        %v591 = vpop.f32.mrb[0].mxu0
        %v592 = vadd.f32 %v508, %v591
        %v593 = vpop.f32.mrb[0].mxu0
        %594 = vmatprep.mubr.bf16.mxu0 0
        %595 = vmatmul.mubr.bf16.gmra.mrb[0].mxu0 %v549
        %v596 = vpop.f32.mrb[0].mxu0
        %v597 = vadd.f32 %v513, %v596
        %v598 = vpop.f32.mrb[0].mxu0
        %v599 = vpop.f32.mrb[0].mxu0
        %v600 = vadd.f32 %v518, %v599
        %v601 = vpop.f32.mrb[0].mxu0
        %602 = vmatprep.mubr.bf16.mxu0 0
        %603 = vmatmul.mubr.bf16.gmra.mrb[0].mxu0 %v552
        %v604 = vpop.f32.mrb[0].mxu0
        %v605 = vadd.f32 %v523, %v604
        %v606 = vpop.f32.mrb[0].mxu0
        %v607 = vpop.f32.mrb[0].mxu0
        %v608 = vadd.f32 %v528, %v607
        %v609 = vpop.f32.mrb[0].mxu0
        %610 = vdwg.mxu0
        %v611 = vmax.f32 %v589, 0.0
        %v612 = vmax.f32 %v592, 0.0
        %v613 = vmax.f32 %v597, 0.0
        %v614 = vmax.f32 %v600, 0.0
        %v615 = vmax.f32 %v605, 0.0
        %v616 = vmax.f32 %v608, 0.0
        %v617 = vld [vmem:[%s5] sm:$0xf]
        %v618 = vld [vmem:[%s5 + $0x4] sm:$0xf]
        %v619 = vld [vmem:[%s5 + $0x8] sm:$0xf]
        %v620 = vld [vmem:[%s5 + $0xc] sm:$0xf]
        %v621 = vpack.c.bf16 %v612, %v611
        %v622 = vpack.c.bf16 %v614, %v613
        %v623 = vpack.c.bf16 %v616, %v615
        %v624 = vld [vmem:[%s6] sm:$0xff]
        %v625 = vld [vmem:[%s6 + $0x8] sm:$0xff]
        %v626 = vld [vmem:[%s6 + $0x10] sm:$0xff]
        %v627 = vld [vmem:[%s6 + $0x18] sm:$0xff]
        %629 = vset.pattern.permute.xlu0 0
        %630 = vperm.xlu0 %629, %v624
        %v631 = vpop.permute.xlu0 %630
        %634 = vset.pattern.permute.xlu0 0
        %635 = vperm.xlu0 %634, %v625
        %v636 = vpop.permute.xlu0 %635
        %639 = vset.pattern.permute.xlu0 0
        %640 = vperm.xlu0 %639, %v626
        %v641 = vpop.permute.xlu0 %640
        %644 = vset.pattern.permute.xlu0 0
        %645 = vperm.xlu0 %644, %v627
        %v646 = vpop.permute.xlu0 %645
        %v652 = vunpack.c.l.b16 %v617
        %v653 = vunpack.c.l.b16 %v618
        %v654 = vunpack.c.l.b16 %v619
        %v655 = vunpack.c.l.b16 %v620
        %v656 = vpack.c.b16 %v653, %v652
        %v657 = vpack.c.b16 %v655, %v654
        %v659 = vsel %vm412, %v656, 0
        %v662 = vsel %vm412, %v657, 0
        %664 = vmatprep.subr.bf16.mxu0 0
        %665 = vmatpush1.bf16.msra.mxu0 %v621
        %666 = vmatprep.subr.bf16.mxu0 0
        %667 = vmatpush1.bf16.msra.mxu0 %v622
        %668 = vmatprep.subr.bf16.mxu0 0
        %669 = vmatpush1.bf16.msra.mxu0 %v623
        %670 = vmatprep.subr.bf16.mxu0 0
        %671 = vmatpush1.bf16.msra.mxu0 0
        %672 = vmatprep.subr.bf16.mxu0 0
        %673 = vmatpush1.bf16.msra.mxu0 0
        %674 = vmatprep.subr.bf16.mxu0 0
        %675 = vmatpush1.bf16.msra.mxu0 0
        %676 = vmatprep.subr.bf16.mxu0 0
        %677 = vmatpush1.bf16.msra.mxu0 0
        %678 = vmatprep.subr.bf16.mxu0 0
        %679 = vmatpush1.bf16.msra.mxu0 0
        %680 = vmatprep.subr.bf16.mxu0 0
        %681 = vmatpush1.bf16.msra.mxu0 0
        %682 = vmatprep.subr.bf16.mxu0 0
        %683 = vmatpush1.bf16.msra.mxu0 0
        %684 = vmatprep.subr.bf16.mxu0 0
        %685 = vmatpush1.bf16.msra.mxu0 0
        %686 = vmatprep.subr.bf16.mxu0 0
        %687 = vmatpush1.bf16.msra.mxu0 0
        %688 = vmatprep.subr.bf16.mxu0 0
        %689 = vmatpush1.bf16.msra.mxu0 0
        %690 = vmatprep.subr.bf16.mxu0 0
        %691 = vmatpush1.bf16.msra.mxu0 0
        %692 = vmatprep.subr.bf16.mxu0 0
        %693 = vmatpush1.bf16.msra.mxu0 0
        %694 = vmatprep.subr.bf16.mxu0 0
        %695 = vmatpush1.bf16.msra.mxu0 0
        %696 = vmatprep.mubr.bf16.mxu0 0
        %697 = vmatmul.mubr.bf16.gmra.mrb[0].mxu0 %v659
        %v698 = vpop.f32.mrb[0].mxu0
        %v699 = vadd.f32 %v631, %v698
        %v700 = vpop.f32.mrb[0].mxu0
        %v701 = vpop.f32.mrb[0].mxu0
        %v702 = vadd.f32 %v636, %v701
        %v703 = vpop.f32.mrb[0].mxu0
        %704 = vmatprep.mubr.bf16.mxu0 0
        %705 = vmatmul.mubr.bf16.gmra.mrb[0].mxu0 %v662
        %v706 = vpop.f32.mrb[0].mxu0
        %v707 = vadd.f32 %v641, %v706
        %v708 = vpop.f32.mrb[0].mxu0
        %v709 = vpop.f32.mrb[0].mxu0
        %v710 = vadd.f32 %v646, %v709
        %v711 = vpop.f32.mrb[0].mxu0
        %712 = vdwg.mxu0
        %713 = vst [vmem:[%s344] sm:$0xff] %v699
        %714 = vst [vmem:[%s344 + $0x8] sm:$0xff] %v702
        %715 = vst [vmem:[%s344 + $0x10] sm:$0xff] %v707
        %716 = vst [vmem:[%s344 + $0x18] sm:$0xff] %v710
        %s717 = sand.u32 %s194, 1
        %s718 = sand.u32 %s194, 1
        %s719 = smul.addr %s718, 32
        %s720 = scalar_lea.vmem [#allocation3], %s719
        // Predicated region
        $region87: #{entropy_parameters_forward.1} parent=81 // pred_check
          %p721 = pneg %p204
        $region88: #{entropy_parameters_forward.1} parent=81 // pred_check_branch
          %723 = sbr.rel (%p721) target = $region90
        $region89: #{entropy_parameters_forward.1} parent=81 // pred_region
          %s724 = smul.addr %s22, 8
          %s725 = sadd.s32 %s23, %s724
          %s726 = smul.addr %s725, 8
          %s727 = scalar_lea.vmem %s7, %s726
          // Predicated region
          $region91: #{entropy_parameters_forward.1} parent=89 // pred_check
            _
          $region92: #{entropy_parameters_forward.1} parent=89 // pred_check_branch
            %729 = sbr.rel (0) target = $region94
          $region93: #{entropy_parameters_forward.1} parent=89 // pred_region
            // Predicated region
            $region95: #{entropy_parameters_forward.1} parent=93 // pred_check
              _
            $region96: #{entropy_parameters_forward.1} parent=93 // pred_check_branch
              %731 = sbr.rel (0) target = $region98
            $region97: #{entropy_parameters_forward.1} parent=93 // pred_region
              // Predicated region
              $region110: #{entropy_parameters_forward.1} parent=97 // pred_check
                _
              $region111: #{entropy_parameters_forward.1} parent=97 // pred_check_branch
                %752 = sbr.rel (0) target = $region113
              $region112: #{entropy_parameters_forward.1} parent=97 // pred_region
                loop: start=0, step=1, limit=1
                $region114: #{entropy_parameters_forward.1} parent=112 // loop_pre_header
                  _
                $region115: #{entropy_parameters_forward.1} parent=112 // loop_header
                  %s754 = sphi 0, %s758
                  %p755 = scmp.ge.s32.totalorder %s754, 1
                  %s759 = sphi %s720, %s720
                  %s760 = sphi %s727, %s727
                $region116: #{entropy_parameters_forward.1} parent=112 // loop_header_branch
                  %757 = sbr.rel (%p755) target = $region120
                $region117: #{entropy_parameters_forward.1} parent=112 // loop_body
                  %v761 = vld [vmem:[%s759] sm:$0xff]
                  %762 = vst [vmem:[%s760] sm:$0xff] %v761
                  %v763 = vld [vmem:[%s759 + $0x8] sm:$0xff]
                  %764 = vst [vmem:[%s760 + $0x10] sm:$0xff] %v763
                  %v765 = vld [vmem:[%s759 + $0x10] sm:$0xff]
                  %766 = vst [vmem:[%s760 + $0x20] sm:$0xff] %v765
                  %v767 = vld [vmem:[%s759 + $0x18] sm:$0xff]
                  %768 = vst [vmem:[%s760 + $0x30] sm:$0xff] %v767
                $region118: #{entropy_parameters_forward.1} parent=112 // loop_footer
                  %s758 = sadd.s32 1, %s754
                $region119: #{entropy_parameters_forward.1} parent=112 // loop_footer_branch
                  %753 = sbr.rel target = $region115
                $region120: #{entropy_parameters_forward.1} parent=112 // loop_exit
                  _
              $region113: #{entropy_parameters_forward.1} parent=97 // pred_fallthru
                _
              // Predicated region
              $region121: #{entropy_parameters_forward.1} parent=97 // pred_check
                _
              $region122: #{entropy_parameters_forward.1} parent=97 // pred_check_branch
                %770 = sbr.rel target = $region124
              $region123: #{entropy_parameters_forward.1} parent=97 // pred_region
                _
              $region124: #{entropy_parameters_forward.1} parent=97 // pred_fallthru
                _
            $region98: #{entropy_parameters_forward.1} parent=93 // pred_fallthru
              _
            // Predicated region
            $region99: #{entropy_parameters_forward.1} parent=93 // pred_check
              _
            $region100: #{entropy_parameters_forward.1} parent=93 // pred_check_branch
              %733 = sbr.rel target = $region102
            $region101: #{entropy_parameters_forward.1} parent=93 // pred_region
              loop: start=0, step=1, limit=1
              $region103: #{entropy_parameters_forward.1} parent=101 // loop_pre_header
                _
              $region104: #{entropy_parameters_forward.1} parent=101 // loop_header
                %s736 = sphi 0, %s740
                %p737 = scmp.ge.s32.totalorder %s736, 1
                %s741 = sphi %s720, %s720
                %s742 = sphi %s727, %s727
              $region105: #{entropy_parameters_forward.1} parent=101 // loop_header_branch
                %739 = sbr.rel (%p737) target = $region109
              $region106: #{entropy_parameters_forward.1} parent=101 // loop_body
                %v743 = vld [vmem:[%s741] sm:$0xff]
                %744 = vst [vmem:[%s742] sm:$0xff] %v743
                %v745 = vld [vmem:[%s741 + $0x8] sm:$0xff]
                %746 = vst [vmem:[%s742 + $0x10] sm:$0xff] %v745
                %v747 = vld [vmem:[%s741 + $0x10] sm:$0xff]
                %748 = vst [vmem:[%s742 + $0x20] sm:$0xff] %v747
                %v749 = vld [vmem:[%s741 + $0x18] sm:$0xff]
                %750 = vst [vmem:[%s742 + $0x30] sm:$0xff] %v749
              $region107: #{entropy_parameters_forward.1} parent=101 // loop_footer
                %s740 = sadd.s32 1, %s736
              $region108: #{entropy_parameters_forward.1} parent=101 // loop_footer_branch
                %735 = sbr.rel target = $region104
              $region109: #{entropy_parameters_forward.1} parent=101 // loop_exit
                _
            $region102: #{entropy_parameters_forward.1} parent=93 // pred_fallthru
              _
          $region94: #{entropy_parameters_forward.1} parent=89 // pred_fallthru
            _
          %771 = vnop
        $region90: #{entropy_parameters_forward.1} parent=81 // pred_fallthru
          _
      $region82: #{entropy_parameters_forward.1} parent=5 // pred_fallthru
        _
      %p772 = scmp.le.s32.totalorder 2, %s13
      // Predicated region
      $region125: #{entropy_parameters_forward.1} parent=5 // pred_check
        %p773 = pneg %p772
      $region126: #{entropy_parameters_forward.1} parent=5 // pred_check_branch
        %775 = sbr.rel (%p773) target = $region128
      $region127: #{entropy_parameters_forward.1} parent=5 // pred_region
        %s776 = ssub.s32 %s13, 2
        // Predicated region
        $region129: #{entropy_parameters_forward.1} parent=127 // pred_check
          %p777 = pneg %p210
        $region130: #{entropy_parameters_forward.1} parent=127 // pred_check_branch
          %779 = sbr.rel (%p777) target = $region132
        $region131: #{entropy_parameters_forward.1} parent=127 // pred_region
          %s780 = sand.u32 %s195, 1
          %s781 = sand.u32 %s195, 1
          %s782 = smul.addr %s781, 32
          %s783 = scalar_lea.vmem [#allocation3], %s782
        $region132: #{entropy_parameters_forward.1} parent=127 // pred_fallthru
          _
      $region128: #{entropy_parameters_forward.1} parent=5 // pred_fallthru
        _
    $region6: #{entropy_parameters_forward.1} parent=1 // loop_footer
      %s17 = sadd.s32 1, %s13
    $region7: #{entropy_parameters_forward.1} parent=1 // loop_footer_branch
      %12 = sbr.rel target = $region3
    $region8: #{entropy_parameters_forward.1} parent=1 // loop_exit
      _

</llo_original>
